<compile_context>
chip_gen: v5e
topology: v5e:2x2
jax: 0.10.0
libtpu: 0.0.40
codegen_flags: <defaults>
</compile_context>

<pallas_src>
import functools

import jax
import jax.numpy as jnp
import numpy as np
from jax import lax
from jax.experimental import pallas as pl
from jax.experimental.pallas import tpu as pltpu


# --------------------------------------------------------------------------
# One-time probe of pltpu.roll's rotation direction.
# "forward" means roll(x, N-d, axis=-1)[l] == x[l+d]  (jnp.roll semantics).
# --------------------------------------------------------------------------
_ROLL_FORWARD = None


def _roll_gathers_forward():
    global _ROLL_FORWARD
    if _ROLL_FORWARD is None:
        def probe(x_ref, o_ref):
            o_ref[...] = pltpu.roll(x_ref[...], 1, axis=1)

        x = jnp.tile(jnp.arange(128, dtype=jnp.float32)[None, :], (8, 1))
        out = pl.pallas_call(
            probe, out_shape=jax.ShapeDtypeStruct((8, 128), jnp.float32))(x)
        _ROLL_FORWARD = bool(np.asarray(out)[0, 0] == 127.0)
    return _ROLL_FORWARD


# --------------------------------------------------------------------------
# Pallas kernel: one batch element per grid step, everything in (H, W*C)
# interleaved lane-dense layout (lane = w*C + c).
# --------------------------------------------------------------------------
def lsk_kernel(x_ref, w0_ref, b0_ref, ws_ref, bs_ref, wp_ref, bp_ref,
               wbc_ref, wf_ref, bf_ref, wa_ref, wm_ref, bsq_ref,
               o_ref,
               xpad_ref, a1pad_ref, avgpad_ref, maxpad_ref,
               *, C, roll_fwd):
    _, H, WC = x_ref.shape
    W = WC // C
    f32 = jnp.float32

    def write_padded(pad_ref, data, pad):
        # Re-zero just the halo strips every step (keeps the batch grid axis
        # safe under megacore "parallel" partitioning), then write the interior.
        fw = (W + 2 * pad) * C
        pad_ref[pl.ds(0, pad), :] = jnp.zeros((pad, fw), f32)
        pad_ref[pl.ds(pad + H, pad), :] = jnp.zeros((pad, fw), f32)
        pad_ref[pl.ds(pad, H), pl.ds(0, pad * C)] = jnp.zeros((H, pad * C), f32)
        pad_ref[pl.ds(pad, H), pl.ds(pad * C + WC, pad * C)] = (
            jnp.zeros((H, pad * C), f32))
        pad_ref[pl.ds(pad, H), pl.ds(pad * C, WC)] = data

    # ---- conv0: depthwise 5x5, padding 2 (lane-dense VPU shift-FMAs) --------
    write_padded(xpad_ref, x_ref[0], 2)
    w0 = w0_ref[...]                                   # (25, WC), 4 vregs
    attn1 = jnp.zeros((H, WC), f32)
    for ki in range(5):
        for kj in range(5):
            tap = xpad_ref[pl.ds(ki, H), pl.ds(kj * C, WC)]
            attn1 = attn1 + tap * w0[ki * 5 + kj]
    attn1 = attn1 + b0_ref[...]

    # ---- conv_spatial: depthwise 7x7, dilation 3, padding 9 -----------------
    write_padded(a1pad_ref, attn1, 9)
    ws = ws_ref[...]                                   # (49, WC), 7 vregs
    attn2 = jnp.zeros((H, WC), f32)
    for ki in range(7):
        for kj in range(7):
            tap = a1pad_ref[pl.ds(3 * ki, H), pl.ds(3 * kj * C, WC)]
            attn2 = attn2 + tap * ws[ki * 7 + kj]
    attn2 = attn2 + bs_ref[...]

    # ---- conv1 & conv2 fused into ONE MXU matmul ----------------------------
    # wp_ref is block-diagonal (2*WC, WC); result lane w*C+j holds conv1
    # channel j (j < C/2) or conv2 channel j-C/2 (j >= C/2), biases included.
    cat = jnp.concatenate([attn1, attn2], axis=1)                 # (H, 2*WC)
    p = jnp.dot(cat, wp_ref[...],
                preferred_element_type=f32) + bp_ref[...]         # (H, WC)

    # ---- per-pixel channel sum / max via in-register lane rolls (XLU) -------
    # Each roll brings p[:, l+d] to lane l; group-start lanes (l = w*C) gather
    # exactly their own C channels (no wraparound since (W-1)*C + C-1 < WC).
    dsum = p
    dmax = p
    for d in range(1, C):
        shift = (WC - d) if roll_fwd else d
        r = pltpu.roll(p, shift, axis=1)
        dsum = dsum + r
        dmax = jnp.maximum(dmax, r)
    # One stacked one-hot matmul broadcasts the group-start values (mean with
    # 1/C folded in, and max) back to every lane of the pixel group.
    both = jnp.concatenate([dsum * (1.0 / C), dmax], axis=0)      # (2H, WC)
    rep = jnp.dot(both, wbc_ref[...], preferred_element_type=f32)
    avg_rep = rep[0:H]
    max_rep = rep[H:2 * H]

    # ---- conv_squeeze: 7x7 (2->2), padding 3, sigmoid ------------------------
    # Both output channels are folded into the lane split (conv1-half lanes get
    # out-channel 0, conv2-half lanes out-channel 1): one accumulator, 2 FMAs
    # per tap, and the sigmoid already sits on the lanes it gates.
    write_padded(avgpad_ref, avg_rep, 3)
    write_padded(maxpad_ref, max_rep, 3)
    wa = wa_ref[...]                                   # (49, WC)
    wm = wm_ref[...]                                   # (49, WC)
    s = jnp.zeros((H, WC), f32)
    for ki in range(7):
        for kj in range(7):
            t = ki * 7 + kj
            a_tap = avgpad_ref[pl.ds(ki, H), pl.ds(kj * C, WC)]
            m_tap = maxpad_ref[pl.ds(ki, H), pl.ds(kj * C, WC)]
            s = s + a_tap * wa[t] + m_tap * wm[t]
    sig = jax.nn.sigmoid(s + bsq_ref[...])

    # ---- gate, final 1x1 conv (half-group pairwise add folded into wf), gate.
    mix = p * sig
    attn = jnp.dot(mix, wf_ref[...],
                   preferred_element_type=f32) + bf_ref[...]
    o_ref[0] = x_ref[0] * attn                         # lane-dense unmasked store


# --------------------------------------------------------------------------
# Wrapper: NCHW <-> interleaved (B, H, W*C), weight re-layout, pallas_call.
# --------------------------------------------------------------------------
def lsk_block_sa(x_nchw, params):
    """params: PyTorch-convention (OIHW) weights of LSKBlock_SA."""
    roll_fwd = _roll_gathers_forward()

    x_nchw = x_nchw.astype(jnp.float32)
    B, C, H, W = x_nchw.shape
    assert C % 2 == 0, "dim must be even"
    Ch = C // 2
    WC = W * C
    f32 = jnp.float32
    eye_w = jnp.eye(W, dtype=f32)

    # Interleaved lane-dense input: lane = w*C + c.
    x_il = jnp.transpose(x_nchw, (0, 2, 3, 1)).reshape(B, H, WC)

    # Depthwise tap weights, tiled along W so one (WC,) row covers an image row.
    w0_hwc = jnp.transpose(params['w0'][:, 0], (1, 2, 0)).reshape(25, C)
    ws_hwc = jnp.transpose(params['ws'][:, 0], (1, 2, 0)).reshape(49, C)
    w0t = jnp.tile(w0_hwc, (1, W)).astype(f32)                    # (25, WC)
    wst = jnp.tile(ws_hwc, (1, W)).astype(f32)                    # (49, WC)
    b0t = jnp.tile(params['b0'].astype(f32), W).reshape(1, WC)
    bst = jnp.tile(params['bs'].astype(f32), W).reshape(1, WC)

    # conv1 / conv2 fused into one block-diagonal weight (interleaved layout).
    w1cc = params['w1'][:, :, 0, 0].T.astype(f32)                 # (C, Ch)
    w2cc = params['w2'][:, :, 0, 0].T.astype(f32)                 # (C, Ch)
    blk1 = jnp.concatenate([w1cc, jnp.zeros((C, Ch), f32)], axis=1)
    blk2 = jnp.concatenate([jnp.zeros((C, Ch), f32), w2cc], axis=1)
    wproj = jnp.concatenate([jnp.kron(eye_w, blk1),
                             jnp.kron(eye_w, blk2)], axis=0)      # (2*WC, WC)
    bpt = jnp.tile(jnp.concatenate([params['b1'], params['b2']]).astype(f32),
                   W).reshape(1, WC)

    # Group-start one-hot broadcast matrix (shared by mean and max).
    e0_blk = jnp.zeros((C, C), f32).at[0, :].set(1.0)
    wbc = jnp.kron(eye_w, e0_blk)                                 # (WC, WC)

    # Final 1x1 conv (dim/2 -> dim); duplicating [wf; wf] per block folds in the
    # "p1*sig0 + p2*sig1" pairwise add across the two half-groups.
    wfm = params['wf'][:, :, 0, 0].T.astype(f32)                  # (Ch, C)
    wfin = jnp.kron(eye_w, jnp.concatenate([wfm, wfm], axis=0))   # (WC, WC)
    bft = jnp.tile(params['bf'].astype(f32), W).reshape(1, WC)

    # conv_squeeze weights, lane-split: conv1-half lanes -> out-channel 0,
    # conv2-half lanes -> out-channel 1 (for both the avg and max inputs).
    wsq = params['wsq'].astype(f32)                               # (out, in, kh, kw)
    out_sel = jnp.concatenate([jnp.zeros((Ch,), jnp.int32),
                               jnp.ones((Ch,), jnp.int32)])       # (C,)
    wa_tap = jnp.stack([wsq[0, 0], wsq[1, 0]], axis=-1).reshape(49, 2)
    wm_tap = jnp.stack([wsq[0, 1], wsq[1, 1]], axis=-1).reshape(49, 2)
    wa = jnp.tile(wa_tap[:, out_sel], (1, W))                     # (49, WC)
    wm = jnp.tile(wm_tap[:, out_sel], (1, W))                     # (49, WC)
    bsqv = jnp.tile(params['bsq'].astype(f32)[out_sel], W).reshape(1, WC)

    vmem_weights = [w0t, b0t, wst, bst, wproj, bpt, wbc, wfin, bft, wa, wm, bsqv]

    def full_spec(a):
        n = a.ndim
        return pl.BlockSpec(a.shape, lambda b, _n=n: (0,) * _n)

    kernel = functools.partial(lsk_kernel, C=C, roll_fwd=roll_fwd)

    out = pl.pallas_call(
        kernel,
        out_shape=jax.ShapeDtypeStruct((B, H, WC), jnp.float32),
        grid=(B,),
        in_specs=([pl.BlockSpec((1, H, WC), lambda b: (b, 0, 0))]
                  + [full_spec(a) for a in vmem_weights]),
        out_specs=pl.BlockSpec((1, H, WC), lambda b: (b, 0, 0)),
        scratch_shapes=[
            pltpu.VMEM((H + 4, (W + 4) * C), jnp.float32),    # pad 2, 5x5 dw conv
            pltpu.VMEM((H + 18, (W + 18) * C), jnp.float32),  # pad 9, dilated 7x7 dw
            pltpu.VMEM((H + 6, (W + 6) * C), jnp.float32),    # pad 3, squeeze (avg)
            pltpu.VMEM((H + 6, (W + 6) * C), jnp.float32),    # pad 3, squeeze (max)
        ],
        compiler_params=pltpu.CompilerParams(
            # Halos are re-zeroed every step, so steps are independent and the
            # batch axis can be megacore-partitioned (2x on v7x).
            dimension_semantics=("parallel",),
            vmem_limit_bytes=32 * 1024 * 1024,
        ),
    )(x_il, *vmem_weights)

    return jnp.transpose(out.reshape(B, H, W, C), (0, 3, 1, 2))   # back to NCHW


# --------------------------------------------------------------------------
# Pure-JAX reference (NCHW, PyTorch conv semantics) for the correctness check.
# --------------------------------------------------------------------------
def lsk_reference_nchw(x, p, C):
    dn = ('NCHW', 'OIHW', 'NCHW')
    hi = lax.Precision.HIGHEST

    def conv(inp, w, pad, dil=1, groups=1):
        return lax.conv_general_dilated(
            inp, w, window_strides=(1, 1), padding=((pad, pad), (pad, pad)),
            rhs_dilation=(dil, dil), feature_group_count=groups,
            dimension_numbers=dn, precision=hi)

    def addb(y, b):
        return y + b[None, :, None, None]

    attn1 = addb(conv(x, p['w0'], 2, 1, C), p['b0'])
    attn2 = addb(conv(attn1, p['ws'], 9, 3, C), p['bs'])
    a1 = addb(conv(attn1, p['w1'], 0), p['b1'])
    a2 = addb(conv(attn2, p['w2'], 0), p['b2'])
    attn = jnp.concatenate([a1, a2], axis=1)
    avg = jnp.mean(attn, axis=1, keepdims=True)
    mx = jnp.max(attn, axis=1, keepdims=True)
    agg = jnp.concatenate([avg, mx], axis=1)
    sig = jax.nn.sigmoid(addb(conv(agg, p['wsq'], 3), p['bsq']))
    attn = a1 * sig[:, 0:1] + a2 * sig[:, 1:2]
    attn = addb(conv(attn, p['wf'], 0), p['bf'])
    return x * attn


# --------------------------------------------------------------------------
if __name__ == "__main__":
    B, dim, H, W = 2, 8, 16, 16
    C, Ch = dim, dim // 2

    key = jax.random.PRNGKey(0)
    ks = jax.random.split(key, 14)
    f32 = jnp.float32

    # PyTorch-convention (OIHW) parameters, deterministically initialized.
    p = dict(
        w0=jax.random.normal(ks[0], (C, 1, 5, 5), f32) * 0.10,
        b0=jax.random.normal(ks[1], (C,), f32) * 0.10,
        ws=jax.random.normal(ks[2], (C, 1, 7, 7), f32) * 0.05,
        bs=jax.random.normal(ks[3], (C,), f32) * 0.10,
        w1=jax.random.normal(ks[4], (Ch, C, 1, 1), f32) * 0.20,
        b1=jax.random.normal(ks[5], (Ch,), f32) * 0.10,
        w2=jax.random.normal(ks[6], (Ch, C, 1, 1), f32) * 0.20,
        b2=jax.random.normal(ks[7], (Ch,), f32) * 0.10,
        wsq=jax.random.normal(ks[8], (2, 2, 7, 7), f32) * 0.10,
        bsq=jax.random.normal(ks[9], (2,), f32) * 0.10,
        wf=jax.random.normal(ks[10], (C, Ch, 1, 1), f32) * 0.20,
        bf=jax.random.normal(ks[11], (C,), f32) * 0.10,
    )

    x = jax.random.normal(ks[12], (B, C, H, W), f32)

    out = jax.block_until_ready(lsk_block_sa(x, p))
    ref = jax.block_until_ready(lsk_reference_nchw(x, p, C))

    np.testing.assert_allclose(np.asarray(out), np.asarray(ref),
                               rtol=5e-3, atol=5e-3)

    print("KERNEL_OK")
</pallas_src>

<mosaic_0001>
module attributes {stable_mosaic.version = 11 : i64} {
  func.func @probe(%arg0: memref<8x128xf32, #tpu.memory_space<vmem>>, %arg1: memref<8x128xf32, #tpu.memory_space<vmem>>) attributes {dimension_semantics = [], scalar_prefetch = 0 : i64, scratch_operands = 0 : i64, tpu.core_type = #tpu.core_type<tc>} {
    %c0 = arith.constant 0 : index
    %c0_0 = arith.constant 0 : index
    %0 = vector.load %arg0[%c0, %c0_0] : memref<8x128xf32, #tpu.memory_space<vmem>>, vector<8x128xf32>
    %c1_i32 = arith.constant 1 : i32
    %1 = tpu.dynamic_rotate %0 by %c1_i32 dim 1 : vector<8x128xf32>, i32 -> vector<8x128xf32>
    %c0_1 = arith.constant 0 : index
    %c0_2 = arith.constant 0 : index
    %2 = vector.load %arg1[%c0_1, %c0_2] : memref<8x128xf32, #tpu.memory_space<vmem>>, vector<8x128xf32>
    tpu.vector_store %arg1[%c0_1, %c0_2], %1 {strides = array<i32>} : memref<8x128xf32, #tpu.memory_space<vmem>>, vector<8x128xf32>,
    return
  }
}

</mosaic_0001>

<llo_original>
// kernel: tpu_custom_call.1
$region0: #{tpu_custom_call.1}
  #allocation0 [shape = 'u32[]', space=smem, size = 0x4, offset = 0x4, fixed_abs, tag = 'smem constant byte address 0x4 - core index']
  #allocation1 [shape = 'u32[72,128]{1,0:T(1,128)}', space=vmem, size = 0x9000, scoped, tag = 'internal scratch']
  %s0 = inlined_call_operand.hbm [shape: f32[8,128], index: 0, kind: input, shape index: {}]
  %s1 = inlined_call_operand.hbm [shape: f32[8,128], index: 1, kind: output, shape index: {}]
  %s2 = sld [smem:[#allocation0]]
  $region18: #{tpu_custom_call.1} parent=0
    _
  %s4 = ssub.s32 1, %s2
  %s5 = scalar_select 0, %s4, %s2
  $region1: #{tpu_custom_call.1} parent=0
    #allocation2 [shape = 'u8[4096]{0}', space=vmem, size = 0x1000, scoped, tag = 'input window, operand 0, single buffered']
    #allocation3 [shape = 's32[1]{0}', space=sflag, size = 0x4, scoped, tag = 'scoped memory for tpu_custom_call.1']
    #allocation4 [shape = 's32[1]{0}', space=sflag, size = 0x4, scoped, tag = 'scoped memory for tpu_custom_call.1']
    #allocation5 [shape = 'u8[4096]{0}', space=vmem, size = 0x1000, scoped, tag = 'output window, operand 0, single buffered']
    %6 = vsyncpa [#allocation3], 0
    %7 = vsyncpa [#allocation4], 0
    // Predicated region
    $region2: #{tpu_custom_call.1} parent=1 // pred_check
      _
    $region3: #{tpu_custom_call.1} parent=1 // pred_check_branch
      %9 = sbr.rel (0) target = $region5
    $region4: #{tpu_custom_call.1} parent=1 // pred_region
      %11 = vsyncadd [#allocation3], 0
      %s13 = sshll.u32 %s0, 4
      %s14 = int_to_ptr.hbm [resolvable:$true] %s13
      %s15 = sshll.u32 [#allocation2], 4
      %s16 = int_to_ptr.vmem [resolvable:$true] %s15
      %18 = dma.hbm_to_vmem [thread:$0]  %s14, 128, %s16, [#allocation3]
    $region5: #{tpu_custom_call.1} parent=1 // pred_fallthru
      _
    // Predicated region
    $region6: #{tpu_custom_call.1} parent=1 // pred_check
      _
    $region7: #{tpu_custom_call.1} parent=1 // pred_check_branch
      %20 = sbr.rel (0) target = $region9
    $region8: #{tpu_custom_call.1} parent=1 // pred_region
      %22 = dma.done [#allocation3], 128
    $region9: #{tpu_custom_call.1} parent=1 // pred_fallthru
      _
    %v23 = vld [vmem:[#allocation2] sm:$0xff]
    %24 = vrot.lane.b32.xlu0 %v23, 1
    %v25 = vpop.permute.xlu0 %24
    %26 = vst [vmem:[#allocation5] sm:$0xff] %v25
    // Predicated region
    $region10: #{tpu_custom_call.1} parent=1 // pred_check
      _
    $region11: #{tpu_custom_call.1} parent=1 // pred_check_branch
      %28 = sbr.rel (0) target = $region13
    $region12: #{tpu_custom_call.1} parent=1 // pred_region
      %30 = vsyncadd [#allocation4], 0
      %s32 = sshll.u32 [#allocation5], 4
      %s33 = int_to_ptr.vmem [resolvable:$true] %s32
      %s34 = sshll.u32 %s1, 4
      %s35 = int_to_ptr.hbm [resolvable:$true] %s34
      %37 = dma.vmem_to_hbm [thread:$0]  %s33, 128, %s35, [#allocation4]
    $region13: #{tpu_custom_call.1} parent=1 // pred_fallthru
      _
    // Predicated region
    $region14: #{tpu_custom_call.1} parent=1 // pred_check
      _
    $region15: #{tpu_custom_call.1} parent=1 // pred_check_branch
      %39 = sbr.rel (0) target = $region17
    $region16: #{tpu_custom_call.1} parent=1 // pred_region
      %41 = dma.done [#allocation4], 128
    $region17: #{tpu_custom_call.1} parent=1 // pred_fallthru
      _
    %42 = vsyncpa [#allocation3], 1
    %43 = vsyncpa [#allocation4], 1

</llo_original>
